<compile_context>
chip_gen: v7x
topology: tpu7x:2x2x1
jax: 0.10.0
libtpu: 0.0.40
codegen_flags: <defaults>
</compile_context>

<pallas_src>
import jax
import jax.numpy as jnp
from jax.experimental import pallas as pl
from jax.experimental.pallas import tpu as pltpu

EPS = 1e-5  # nn.LayerNorm default eps
NP = 128    # lane-dense padded width for the 1-wide value-head weight


def _round_up(n, m):
    return ((n + m - 1) // m) * m


def _layernorm(x, g, b):
    # Two-pass statistics (center, then square) in f32: numerically safe even
    # for raw, un-normalized observations with |mean| >> std.
    m = jnp.mean(x, axis=-1, keepdims=True)
    c = x - m
    var = jnp.mean(c * c, axis=-1, keepdims=True)
    return c * jax.lax.rsqrt(var + EPS) * g + b


def _critic_kernel(x_ref,
                   ln0_g, ln0_b,
                   w1, b1, ln1_g, ln1_b,
                   w2, b2, ln2_g, ln2_b,
                   wv, bv,
                   v_ref):
    x = x_ref[...].astype(jnp.float32)

    # l0: LayerNorm(input_dim)
    h = _layernorm(x, ln0_g[...], ln0_b[...])

    # l1: Linear -> ReLU -> LayerNorm   (bf16 at the MXU, f32 accumulate)
    h = jnp.dot(h.astype(jnp.bfloat16), w1[...],
                preferred_element_type=jnp.float32) + b1[...]
    h = _layernorm(jnp.maximum(h, 0.0), ln1_g[...], ln1_b[...])

    # l2: Linear -> ReLU -> LayerNorm
    h = jnp.dot(h.astype(jnp.bfloat16), w2[...],
                preferred_element_type=jnp.float32) + b2[...]
    h = _layernorm(jnp.maximum(h, 0.0), ln2_g[...], ln2_b[...])

    # value head: 128-wide lane-padded MXU matmul (MXU is otherwise idle here),
    # but only the real column 0 is written out (+ the (1,1) bias).
    v = jnp.dot(h.astype(jnp.bfloat16), wv[...],
                preferred_element_type=jnp.float32)
    v_ref[...] = (v[:, :1] + bv[...]).astype(v_ref.dtype)


def _choose_block_b(B, D, H):
    """VMEM-aware batch-tile choice.

    * B < 256: single grid step (nothing worth splitting).
    * B >= 256: at least 2 grid steps (v7x dual-TensorCore sharding of the
      "parallel" axis; DMA/compute overlap on v5e/v6e), tiles up to 4096 rows
      so per-step pipeline overhead stays negligible for large B.
    * Always capped by a scoped-VMEM budget derived from D and H so a large
      input_dim*frame_stack cannot spill (v7x 64 MiB physical, v5e 16 MiB
      default scoped limit).
    """
    per_row = 4 * 2 * (D + 1)            # double-buffered x block + out block
    per_row += 4 * (2 * D + 6 * H)       # in-kernel f32/bf16 activation estimate
    vmem_cap = max(128, ((20 << 20) // per_row) // 8 * 8)

    if B < 256:
        blk = _round_up(B, 8)
    else:
        blk = min(4096, _round_up(-(-B // 2), 8))   # >= 2 grid steps
    return max(8, min(blk, vmem_cap))


def _vmem_limit_bytes(block_b, D, H):
    """Scoped-VMEM limit estimate; None if the default limit is plenty."""
    xfer = 2 * block_b * (D + 1) * 4                       # x + out, double-buffered
    consts = 2 * (2 * (D * H + H * H + H * NP)             # bf16 weights (2 buffers)
                  + 4 * (2 * D + 6 * H + 1))               # f32 biases / LN params
    acts = block_b * (2 * D + 6 * H) * 4                   # in-kernel temporaries
    est = xfer + consts + acts
    if est <= (12 << 20):
        return None                                        # fits every chip's default
    return int(min(40 << 20, est + (8 << 20)))


def prepare_params(params):
    """One-time preprocessing, hoisted out of the per-call forward:
    bf16 weight casts for the MXU and lane-padding of the 1-wide value head."""
    p = dict(params)
    p["w1"] = params["w1"].astype(jnp.bfloat16)
    p["w2"] = params["w2"].astype(jnp.bfloat16)
    wv = params["wv"]
    p["wv"] = jnp.pad(wv, ((0, 0), (0, NP - wv.shape[1]))).astype(jnp.bfloat16)
    return p


def net_critic_mlp_forward(x, params, *, block_b=None):
    """Fused forward pass. x: (B, input_dim*frame_stack) f32 -> value (B, 1) f32.

    `params` should come from prepare_params() (bf16 MXU weights, lane-padded
    value head); raw f32 params are auto-prepared as a fallback.
    """
    B, D = x.shape
    H = params["w1"].shape[1]
    if params["w1"].dtype != jnp.bfloat16 or params["wv"].shape[1] != NP:
        params = prepare_params(params)   # fallback; callers should hoist this

    if block_b is None:
        block_b = _choose_block_b(B, D, H)
    block_b = max(8, _round_up(block_b, 8))
    Bp = _round_up(B, block_b)
    if Bp != B:
        x = jnp.pad(x, ((0, Bp - B), (0, 0)))

    full = lambda shape: pl.BlockSpec(shape, lambda i: (0, 0))

    grid_spec = pltpu.PrefetchScalarGridSpec(
        num_scalar_prefetch=0,
        grid=(Bp // block_b,),
        in_specs=[
            pl.BlockSpec((block_b, D), lambda i: (i, 0)),  # x
            full((1, D)), full((1, D)),                    # ln0 gamma/beta
            full((D, H)), full((1, H)),                    # w1, b1
            full((1, H)), full((1, H)),                    # ln1 gamma/beta
            full((H, H)), full((1, H)),                    # w2, b2
            full((1, H)), full((1, H)),                    # ln2 gamma/beta
            full((H, NP)), full((1, 1)),                   # wv (lane-padded), bv
        ],
        out_specs=pl.BlockSpec((block_b, 1), lambda i: (i, 0)),
    )

    v = pl.pallas_call(
        _critic_kernel,
        out_shape=jax.ShapeDtypeStruct((Bp, 1), jnp.float32),
        grid_spec=grid_spec,
        compiler_params=pltpu.CompilerParams(
            dimension_semantics=("parallel",),
            vmem_limit_bytes=_vmem_limit_bytes(block_b, D, H)),
    )(
        x,
        params["ln0_g"], params["ln0_b"],
        params["w1"], params["b1"], params["ln1_g"], params["ln1_b"],
        params["w2"], params["b2"], params["ln2_g"], params["ln2_b"],
        params["wv"], params["bv"],
    )
    return v[:B]


def init_params(key, input_dim, hidden_size=256, frame_stack=4):
    """Deterministic synthetic init matching Net_Critic_MLP.__init__ shapes."""
    D = input_dim * frame_stack
    H = hidden_size
    gain = jnp.sqrt(2.0)  # init.calculate_gain('relu')
    k1, k2, k3 = jax.random.split(key, 3)
    ortho = jax.nn.initializers.orthogonal
    return {
        # LayerNorm params (PyTorch default: weight=1, bias=0)
        "ln0_g": jnp.ones((1, D), jnp.float32), "ln0_b": jnp.zeros((1, D), jnp.float32),
        "ln1_g": jnp.ones((1, H), jnp.float32), "ln1_b": jnp.zeros((1, H), jnp.float32),
        "ln2_g": jnp.ones((1, H), jnp.float32), "ln2_b": jnp.zeros((1, H), jnp.float32),
        # Linear layers: orthogonal(gain) weights, zero bias. Stored as (in, out).
        "w1": ortho(scale=gain)(k1, (D, H), jnp.float32), "b1": jnp.zeros((1, H), jnp.float32),
        "w2": ortho(scale=gain)(k2, (H, H), jnp.float32), "b2": jnp.zeros((1, H), jnp.float32),
        # value head: orthogonal(gain=1), zero bias
        "wv": ortho(scale=1.0)(k3, (H, 1), jnp.float32), "bv": jnp.zeros((1, 1), jnp.float32),
    }


def _reference_forward_bf16(x, p):
    """Mirrors the kernel exactly (bf16 at dot boundaries, two-pass f32 LN)."""
    def ln(v, g, b):
        m = jnp.mean(v, axis=-1, keepdims=True)
        c = v - m
        var = jnp.mean(c * c, axis=-1, keepdims=True)
        return c * jax.lax.rsqrt(var + EPS) * g + b
    dot = lambda a, w: jnp.dot(a.astype(jnp.bfloat16), w.astype(jnp.bfloat16),
                               preferred_element_type=jnp.float32)
    h = ln(x, p["ln0_g"], p["ln0_b"])
    h = ln(jnp.maximum(dot(h, p["w1"]) + p["b1"], 0.0), p["ln1_g"], p["ln1_b"])
    h = ln(jnp.maximum(dot(h, p["w2"]) + p["b2"], 0.0), p["ln2_g"], p["ln2_b"])
    return dot(h, p["wv"]) + p["bv"]


def _reference_forward_f32(x, p):
    """Pure f32 reference of the PyTorch module."""
    def ln(v, g, b):
        m = jnp.mean(v, axis=-1, keepdims=True)
        var = jnp.mean(jnp.square(v - m), axis=-1, keepdims=True)
        return (v - m) / jnp.sqrt(var + EPS) * g + b
    h = ln(x, p["ln0_g"], p["ln0_b"])
    h = ln(jnp.maximum(h @ p["w1"] + p["b1"], 0.0), p["ln1_g"], p["ln1_b"])
    h = ln(jnp.maximum(h @ p["w2"] + p["b2"], 0.0), p["ln2_g"], p["ln2_b"])
    return h @ p["wv"] + p["bv"]


if __name__ == "__main__":
    # Small shapes consistent with the module: input_dim=8, frame_stack=4 -> D=32
    batch, input_dim, hidden, frame_stack = 8, 8, 32, 4

    key = jax.random.PRNGKey(0)
    kx, kp = jax.random.split(key)
    params = init_params(kp, input_dim, hidden_size=hidden, frame_stack=frame_stack)
    x = jax.random.normal(kx, (batch, input_dim * frame_stack), jnp.float32)

    prepared = prepare_params(params)          # one-time weight prep (hoisted)
    fwd = jax.jit(lambda xx: net_critic_mlp_forward(xx, prepared))

    value = jax.block_until_ready(fwd(x))

    v_ref_bf16 = _reference_forward_bf16(x, params)
    v_ref_f32 = _reference_forward_f32(x, params)

    assert value.shape == (batch, 1)
    assert jnp.allclose(value, v_ref_bf16, atol=2e-3, rtol=2e-3)   # kernel-exact path
    assert jnp.allclose(value, v_ref_f32, atol=5e-2, rtol=5e-2)    # sanity vs pure f32

    print("KERNEL_OK")
</pallas_src>

<mosaic_0001>
module attributes {stable_mosaic.version = 11 : i64} {
  func.func @_critic_kernel(%arg0: i32, %arg1: memref<8x32xf32, #tpu.memory_space<vmem>>, %arg2: memref<1x32xf32, #tpu.memory_space<vmem>>, %arg3: memref<1x32xf32, #tpu.memory_space<vmem>>, %arg4: memref<32x32xbf16, #tpu.memory_space<vmem>>, %arg5: memref<1x32xf32, #tpu.memory_space<vmem>>, %arg6: memref<1x32xf32, #tpu.memory_space<vmem>>, %arg7: memref<1x32xf32, #tpu.memory_space<vmem>>, %arg8: memref<32x32xbf16, #tpu.memory_space<vmem>>, %arg9: memref<1x32xf32, #tpu.memory_space<vmem>>, %arg10: memref<1x32xf32, #tpu.memory_space<vmem>>, %arg11: memref<1x32xf32, #tpu.memory_space<vmem>>, %arg12: memref<32x128xbf16, #tpu.memory_space<vmem>>, %arg13: memref<1x1xf32, #tpu.memory_space<vmem>>, %arg14: memref<8x1xf32, #tpu.memory_space<vmem>>) attributes {dimension_semantics = [#tpu.dimension_semantics<parallel>], iteration_bounds = array<i64: 1>, scalar_prefetch = 0 : i64, scratch_operands = 0 : i64, tpu.core_type = #tpu.core_type<tc>, window_params = [{transform_indices = @transform_0, window_bounds = array<i64: 8, 32>}, {pipeline_mode = #tpu.pipeline_mode<synchronous>, transform_indices = @transform_1, window_bounds = array<i64: 1, 32>}, {pipeline_mode = #tpu.pipeline_mode<synchronous>, transform_indices = @transform_2, window_bounds = array<i64: 1, 32>}, {pipeline_mode = #tpu.pipeline_mode<synchronous>, transform_indices = @transform_3, window_bounds = array<i64: 32, 32>}, {pipeline_mode = #tpu.pipeline_mode<synchronous>, transform_indices = @transform_4, window_bounds = array<i64: 1, 32>}, {pipeline_mode = #tpu.pipeline_mode<synchronous>, transform_indices = @transform_5, window_bounds = array<i64: 1, 32>}, {pipeline_mode = #tpu.pipeline_mode<synchronous>, transform_indices = @transform_6, window_bounds = array<i64: 1, 32>}, {pipeline_mode = #tpu.pipeline_mode<synchronous>, transform_indices = @transform_7, window_bounds = array<i64: 32, 32>}, {pipeline_mode = #tpu.pipeline_mode<synchronous>, transform_indices = @transform_8, window_bounds = array<i64: 1, 32>}, {pipeline_mode = #tpu.pipeline_mode<synchronous>, transform_indices = @transform_9, window_bounds = array<i64: 1, 32>}, {pipeline_mode = #tpu.pipeline_mode<synchronous>, transform_indices = @transform_10, window_bounds = array<i64: 1, 32>}, {pipeline_mode = #tpu.pipeline_mode<synchronous>, transform_indices = @transform_11, window_bounds = array<i64: 32, 128>}, {pipeline_mode = #tpu.pipeline_mode<synchronous>, transform_indices = @transform_12, window_bounds = array<i64: 1, 1>}, {transform_indices = @transform_13, window_bounds = array<i64: 8, 1>}]} {
    %c0 = arith.constant 0 : index
    %c0_0 = arith.constant 0 : index
    %0 = vector.load %arg1[%c0, %c0_0] : memref<8x32xf32, #tpu.memory_space<vmem>>, vector<8x32xf32>
    %c0_1 = arith.constant 0 : index
    %c0_2 = arith.constant 0 : index
    %1 = vector.load %arg2[%c0_1, %c0_2] : memref<1x32xf32, #tpu.memory_space<vmem>>, vector<1x32xf32>
    %c0_3 = arith.constant 0 : index
    %c0_4 = arith.constant 0 : index
    %2 = vector.load %arg3[%c0_3, %c0_4] : memref<1x32xf32, #tpu.memory_space<vmem>>, vector<1x32xf32>
    %cst = arith.constant dense<0.000000e+00> : vector<8xf32>
    %3 = vector.multi_reduction <add>, %0, %cst [1] : vector<8x32xf32> to vector<8xf32>
    %4 = vector.shape_cast %3 : vector<8xf32> to vector<8x1xf32>
    %cst_5 = arith.constant 3.200000e+01 : f32
    %5 = vector.broadcast %cst_5 : f32 to vector<8x1xf32>
    %6 = arith.divf %4, %5 : vector<8x1xf32>
    %7 = vector.broadcast %6 : vector<8x1xf32> to vector<8x32xf32>
    %8 = arith.subf %0, %7 : vector<8x32xf32>
    %9 = arith.mulf %8, %8 : vector<8x32xf32>
    %cst_6 = arith.constant dense<0.000000e+00> : vector<8xf32>
    %10 = vector.multi_reduction <add>, %9, %cst_6 [1] : vector<8x32xf32> to vector<8xf32>
    %11 = vector.shape_cast %10 : vector<8xf32> to vector<8x1xf32>
    %cst_7 = arith.constant 3.200000e+01 : f32
    %12 = vector.broadcast %cst_7 : f32 to vector<8x1xf32>
    %13 = arith.divf %11, %12 : vector<8x1xf32>
    %cst_8 = arith.constant 9.99999974E-6 : f32
    %14 = vector.broadcast %cst_8 : f32 to vector<8x1xf32>
    %15 = arith.addf %13, %14 : vector<8x1xf32>
    %16 = math.rsqrt %15 : vector<8x1xf32>
    %17 = vector.broadcast %16 : vector<8x1xf32> to vector<8x32xf32>
    %18 = arith.mulf %8, %17 : vector<8x32xf32>
    %19 = vector.broadcast %1 : vector<1x32xf32> to vector<8x32xf32>
    %20 = arith.mulf %18, %19 : vector<8x32xf32>
    %21 = vector.broadcast %2 : vector<1x32xf32> to vector<8x32xf32>
    %22 = arith.addf %20, %21 : vector<8x32xf32>
    %23 = arith.truncf %22 : vector<8x32xf32> to vector<8x32xbf16>
    %c0_9 = arith.constant 0 : index
    %c0_10 = arith.constant 0 : index
    %24 = vector.load %arg4[%c0_9, %c0_10] : memref<32x32xbf16, #tpu.memory_space<vmem>>, vector<32x32xbf16>
    %cst_11 = arith.constant dense<0.000000e+00> : vector<8x32xf32>
    %25 = tpu.matmul %23, %24, %cst_11 {dimension_numbers = #tpu.dot_dimension_numbers<[1], [0], [0], [1], [0, 0, 1, 1], [], []>} : vector<8x32xbf16>, vector<32x32xbf16>, vector<8x32xf32> -> vector<8x32xf32>
    %c0_12 = arith.constant 0 : index
    %c0_13 = arith.constant 0 : index
    %26 = vector.load %arg5[%c0_12, %c0_13] : memref<1x32xf32, #tpu.memory_space<vmem>>, vector<1x32xf32>
    %27 = vector.broadcast %26 : vector<1x32xf32> to vector<8x32xf32>
    %28 = arith.addf %25, %27 : vector<8x32xf32>
    %cst_14 = arith.constant 0.000000e+00 : f32
    %29 = vector.broadcast %cst_14 : f32 to vector<8x32xf32>
    %30 = arith.maximumf %28, %29 : vector<8x32xf32>
    %c0_15 = arith.constant 0 : index
    %c0_16 = arith.constant 0 : index
    %31 = vector.load %arg6[%c0_15, %c0_16] : memref<1x32xf32, #tpu.memory_space<vmem>>, vector<1x32xf32>
    %c0_17 = arith.constant 0 : index
    %c0_18 = arith.constant 0 : index
    %32 = vector.load %arg7[%c0_17, %c0_18] : memref<1x32xf32, #tpu.memory_space<vmem>>, vector<1x32xf32>
    %cst_19 = arith.constant dense<0.000000e+00> : vector<8xf32>
    %33 = vector.multi_reduction <add>, %30, %cst_19 [1] : vector<8x32xf32> to vector<8xf32>
    %34 = vector.shape_cast %33 : vector<8xf32> to vector<8x1xf32>
    %cst_20 = arith.constant 3.200000e+01 : f32
    %35 = vector.broadcast %cst_20 : f32 to vector<8x1xf32>
    %36 = arith.divf %34, %35 : vector<8x1xf32>
    %37 = vector.broadcast %36 : vector<8x1xf32> to vector<8x32xf32>
    %38 = arith.subf %30, %37 : vector<8x32xf32>
    %39 = arith.mulf %38, %38 : vector<8x32xf32>
    %cst_21 = arith.constant dense<0.000000e+00> : vector<8xf32>
    %40 = vector.multi_reduction <add>, %39, %cst_21 [1] : vector<8x32xf32> to vector<8xf32>
    %41 = vector.shape_cast %40 : vector<8xf32> to vector<8x1xf32>
    %cst_22 = arith.constant 3.200000e+01 : f32
    %42 = vector.broadcast %cst_22 : f32 to vector<8x1xf32>
    %43 = arith.divf %41, %42 : vector<8x1xf32>
    %cst_23 = arith.constant 9.99999974E-6 : f32
    %44 = vector.broadcast %cst_23 : f32 to vector<8x1xf32>
    %45 = arith.addf %43, %44 : vector<8x1xf32>
    %46 = math.rsqrt %45 : vector<8x1xf32>
    %47 = vector.broadcast %46 : vector<8x1xf32> to vector<8x32xf32>
    %48 = arith.mulf %38, %47 : vector<8x32xf32>
    %49 = vector.broadcast %31 : vector<1x32xf32> to vector<8x32xf32>
    %50 = arith.mulf %48, %49 : vector<8x32xf32>
    %51 = vector.broadcast %32 : vector<1x32xf32> to vector<8x32xf32>
    %52 = arith.addf %50, %51 : vector<8x32xf32>
    %53 = arith.truncf %52 : vector<8x32xf32> to vector<8x32xbf16>
    %c0_24 = arith.constant 0 : index
    %c0_25 = arith.constant 0 : index
    %54 = vector.load %arg8[%c0_24, %c0_25] : memref<32x32xbf16, #tpu.memory_space<vmem>>, vector<32x32xbf16>
    %cst_26 = arith.constant dense<0.000000e+00> : vector<8x32xf32>
    %55 = tpu.matmul %53, %54, %cst_26 {dimension_numbers = #tpu.dot_dimension_numbers<[1], [0], [0], [1], [0, 0, 1, 1], [], []>} : vector<8x32xbf16>, vector<32x32xbf16>, vector<8x32xf32> -> vector<8x32xf32>
    %c0_27 = arith.constant 0 : index
    %c0_28 = arith.constant 0 : index
    %56 = vector.load %arg9[%c0_27, %c0_28] : memref<1x32xf32, #tpu.memory_space<vmem>>, vector<1x32xf32>
    %57 = vector.broadcast %56 : vector<1x32xf32> to vector<8x32xf32>
    %58 = arith.addf %55, %57 : vector<8x32xf32>
    %cst_29 = arith.constant 0.000000e+00 : f32
    %59 = vector.broadcast %cst_29 : f32 to vector<8x32xf32>
    %60 = arith.maximumf %58, %59 : vector<8x32xf32>
    %c0_30 = arith.constant 0 : index
    %c0_31 = arith.constant 0 : index
    %61 = vector.load %arg10[%c0_30, %c0_31] : memref<1x32xf32, #tpu.memory_space<vmem>>, vector<1x32xf32>
    %c0_32 = arith.constant 0 : index
    %c0_33 = arith.constant 0 : index
    %62 = vector.load %arg11[%c0_32, %c0_33] : memref<1x32xf32, #tpu.memory_space<vmem>>, vector<1x32xf32>
    %cst_34 = arith.constant dense<0.000000e+00> : vector<8xf32>
    %63 = vector.multi_reduction <add>, %60, %cst_34 [1] : vector<8x32xf32> to vector<8xf32>
    %64 = vector.shape_cast %63 : vector<8xf32> to vector<8x1xf32>
    %cst_35 = arith.constant 3.200000e+01 : f32
    %65 = vector.broadcast %cst_35 : f32 to vector<8x1xf32>
    %66 = arith.divf %64, %65 : vector<8x1xf32>
    %67 = vector.broadcast %66 : vector<8x1xf32> to vector<8x32xf32>
    %68 = arith.subf %60, %67 : vector<8x32xf32>
    %69 = arith.mulf %68, %68 : vector<8x32xf32>
    %cst_36 = arith.constant dense<0.000000e+00> : vector<8xf32>
    %70 = vector.multi_reduction <add>, %69, %cst_36 [1] : vector<8x32xf32> to vector<8xf32>
    %71 = vector.shape_cast %70 : vector<8xf32> to vector<8x1xf32>
    %cst_37 = arith.constant 3.200000e+01 : f32
    %72 = vector.broadcast %cst_37 : f32 to vector<8x1xf32>
    %73 = arith.divf %71, %72 : vector<8x1xf32>
    %cst_38 = arith.constant 9.99999974E-6 : f32
    %74 = vector.broadcast %cst_38 : f32 to vector<8x1xf32>
    %75 = arith.addf %73, %74 : vector<8x1xf32>
    %76 = math.rsqrt %75 : vector<8x1xf32>
    %77 = vector.broadcast %76 : vector<8x1xf32> to vector<8x32xf32>
    %78 = arith.mulf %68, %77 : vector<8x32xf32>
    %79 = vector.broadcast %61 : vector<1x32xf32> to vector<8x32xf32>
    %80 = arith.mulf %78, %79 : vector<8x32xf32>
    %81 = vector.broadcast %62 : vector<1x32xf32> to vector<8x32xf32>
    %82 = arith.addf %80, %81 : vector<8x32xf32>
    %83 = arith.truncf %82 : vector<8x32xf32> to vector<8x32xbf16>
    %c0_39 = arith.constant 0 : index
    %c0_40 = arith.constant 0 : index
    %84 = vector.load %arg12[%c0_39, %c0_40] : memref<32x128xbf16, #tpu.memory_space<vmem>>, vector<32x128xbf16>
    %cst_41 = arith.constant dense<0.000000e+00> : vector<8x128xf32>
    %85 = tpu.matmul %83, %84, %cst_41 {dimension_numbers = #tpu.dot_dimension_numbers<[1], [0], [0], [1], [0, 0, 1, 1], [], []>} : vector<8x32xbf16>, vector<32x128xbf16>, vector<8x128xf32> -> vector<8x128xf32>
    %86 = vector.extract_strided_slice %85 {offsets = [0, 0], sizes = [8, 1], strides = [1, 1]} : vector<8x128xf32> to vector<8x1xf32>
    %c0_42 = arith.constant 0 : index
    %c0_43 = arith.constant 0 : index
    %87 = vector.load %arg13[%c0_42, %c0_43] : memref<1x1xf32, #tpu.memory_space<vmem>>, vector<1x1xf32>
    %88 = vector.broadcast %87 : vector<1x1xf32> to vector<8x1xf32>
    %89 = arith.addf %86, %88 : vector<8x1xf32>
    %c0_44 = arith.constant 0 : index
    %c0_45 = arith.constant 0 : index
    %90 = vector.load %arg14[%c0_44, %c0_45] : memref<8x1xf32, #tpu.memory_space<vmem>>, vector<8x1xf32>
    tpu.vector_store %arg14[%c0_44, %c0_45], %89 {strides = array<i32>} : memref<8x1xf32, #tpu.memory_space<vmem>>, vector<8x1xf32>,
    return
  }
  func.func @transform_0(%arg0: i32) -> (i32, i32) {
    %c0_i32 = arith.constant 0 : i32
    %c0_i32_0 = arith.constant 0 : i32
    return %arg0, %c0_i32 : i32, i32
  }
  func.func @transform_1(%arg0: i32) -> (i32, i32) {
    %c0_i32 = arith.constant 0 : i32
    %c0_i32_0 = arith.constant 0 : i32
    %c0_i32_1 = arith.constant 0 : i32
    return %c0_i32, %c0_i32_0 : i32, i32
  }
  func.func @transform_2(%arg0: i32) -> (i32, i32) {
    %c0_i32 = arith.constant 0 : i32
    %c0_i32_0 = arith.constant 0 : i32
    %c0_i32_1 = arith.constant 0 : i32
    return %c0_i32, %c0_i32_0 : i32, i32
  }
  func.func @transform_3(%arg0: i32) -> (i32, i32) {
    %c0_i32 = arith.constant 0 : i32
    %c0_i32_0 = arith.constant 0 : i32
    %c0_i32_1 = arith.constant 0 : i32
    return %c0_i32, %c0_i32_0 : i32, i32
  }
  func.func @transform_4(%arg0: i32) -> (i32, i32) {
    %c0_i32 = arith.constant 0 : i32
    %c0_i32_0 = arith.constant 0 : i32
    %c0_i32_1 = arith.constant 0 : i32
    return %c0_i32, %c0_i32_0 : i32, i32
  }
  func.func @transform_5(%arg0: i32) -> (i32, i32) {
    %c0_i32 = arith.constant 0 : i32
    %c0_i32_0 = arith.constant 0 : i32
    %c0_i32_1 = arith.constant 0 : i32
    return %c0_i32, %c0_i32_0 : i32, i32
  }
  func.func @transform_6(%arg0: i32) -> (i32, i32) {
    %c0_i32 = arith.constant 0 : i32
    %c0_i32_0 = arith.constant 0 : i32
    %c0_i32_1 = arith.constant 0 : i32
    return %c0_i32, %c0_i32_0 : i32, i32
  }
  func.func @transform_7(%arg0: i32) -> (i32, i32) {
    %c0_i32 = arith.constant 0 : i32
    %c0_i32_0 = arith.constant 0 : i32
    %c0_i32_1 = arith.constant 0 : i32
    return %c0_i32, %c0_i32_0 : i32, i32
  }
  func.func @transform_8(%arg0: i32) -> (i32, i32) {
    %c0_i32 = arith.constant 0 : i32
    %c0_i32_0 = arith.constant 0 : i32
    %c0_i32_1 = arith.constant 0 : i32
    return %c0_i32, %c0_i32_0 : i32, i32
  }
  func.func @transform_9(%arg0: i32) -> (i32, i32) {
    %c0_i32 = arith.constant 0 : i32
    %c0_i32_0 = arith.constant 0 : i32
    %c0_i32_1 = arith.constant 0 : i32
    return %c0_i32, %c0_i32_0 : i32, i32
  }
  func.func @transform_10(%arg0: i32) -> (i32, i32) {
    %c0_i32 = arith.constant 0 : i32
    %c0_i32_0 = arith.constant 0 : i32
    %c0_i32_1 = arith.constant 0 : i32
    return %c0_i32, %c0_i32_0 : i32, i32
  }
  func.func @transform_11(%arg0: i32) -> (i32, i32) {
    %c0_i32 = arith.constant 0 : i32
    %c0_i32_0 = arith.constant 0 : i32
    %c0_i32_1 = arith.constant 0 : i32
    return %c0_i32, %c0_i32_0 : i32, i32
  }
  func.func @transform_12(%arg0: i32) -> (i32, i32) {
    %c0_i32 = arith.constant 0 : i32
    %c0_i32_0 = arith.constant 0 : i32
    %c0_i32_1 = arith.constant 0 : i32
    return %c0_i32, %c0_i32_0 : i32, i32
  }
  func.func @transform_13(%arg0: i32) -> (i32, i32) {
    %c0_i32 = arith.constant 0 : i32
    %c0_i32_0 = arith.constant 0 : i32
    return %arg0, %c0_i32 : i32, i32
  }
}

</mosaic_0001>

<llo_original>
// kernel: _lambda_.1
$region0: #{_lambda_.1}
  #allocation0 [shape = 'u32[]', space=smem, size = 0x4, offset = 0x4, fixed_abs, tag = 'smem constant byte address 0x4 - core index']
  #allocation1 [shape = 'u32[144,128]{1,0:T(1,128)}', space=vmem, size = 0x12000, scoped, tag = 'internal scratch']
  #allocation2 [shape = 'f32[1,1]{1,0:T(1,128)S(1)}', space=vmem, size = 0x200, scoped, tag = 'scoped memory for _lambda_.1']
  %s0 = inlined_call_operand.hbm [shape: f32[8,32], index: 0, kind: input, shape index: {}]
  %s1 = inlined_call_operand.vmem [shape: f32[1,32], index: 1, kind: input, shape index: {}, may-alias: {1,5,9}]
  %s2 = inlined_call_operand.vmem [shape: f32[1,32], index: 2, kind: input, shape index: {}, may-alias: {2,4,6,8,10}]
  %s3 = inlined_call_operand.hbm [shape: bf16[32,32], index: 3, kind: input, shape index: {}]
  %s4 = inlined_call_operand.vmem [shape: f32[1,32], index: 4, kind: input, shape index: {}, may-alias: {2,4,6,8,10}]
  %s5 = inlined_call_operand.vmem [shape: f32[1,32], index: 5, kind: input, shape index: {}, may-alias: {1,5,9}]
  %s6 = inlined_call_operand.vmem [shape: f32[1,32], index: 6, kind: input, shape index: {}, may-alias: {2,4,6,8,10}]
  %s7 = inlined_call_operand.vmem [shape: bf16[32,32], index: 7, kind: input, shape index: {}]
  %s8 = inlined_call_operand.vmem [shape: f32[1,32], index: 8, kind: input, shape index: {}, may-alias: {2,4,6,8,10}]
  %s9 = inlined_call_operand.vmem [shape: f32[1,32], index: 9, kind: input, shape index: {}, may-alias: {1,5,9}]
  %s10 = inlined_call_operand.vmem [shape: f32[1,32], index: 10, kind: input, shape index: {}, may-alias: {2,4,6,8,10}]
  %s11 = inlined_call_operand.vmem [shape: bf16[32,128], index: 11, kind: input, shape index: {}]
  %s12 = inlined_call_operand.<no memory space> [shape: f32[1,1], index: 12, kind: input, shape index: {}]
  %s13 = inlined_call_operand.vmem [shape: f32[8,1], index: 13, kind: output, shape index: {}]
  %s14 = sld [smem:[#allocation0]]
  $region70: #{_lambda_.1} parent=0
    _
  %s16 = ssub.s32 1, %s14
  %s17 = scalar_select 0, %s16, %s14
  %v18 = vstv %s12
  %19 = vst [vmem:[#allocation2] sm:$0x1] %v18
  $region1: #{_lambda_.1} parent=0
    #allocation3 [shape = 'u8[4096]{0}', space=vmem, size = 0x1000, scoped, tag = 'input window, operand 0, single buffered']
    #allocation4 [shape = 's32[1]{0}', space=sflag, size = 0x4, scoped, tag = 'scoped memory for _lambda_.1']
    #allocation5 [shape = 'u8[8192]{0}', space=vmem, size = 0x2000, scoped, tag = 'input window, operand 3, single buffered']
    #allocation6 [shape = 's32[1]{0}', space=sflag, size = 0x4, scoped, tag = 'scoped memory for _lambda_.1']
    %20 = vsyncpa [#allocation4], 0
    %21 = vsyncpa [#allocation6], 0
    // Predicated region
    $region2: #{_lambda_.1} parent=1 // pred_check
      _
    $region3: #{_lambda_.1} parent=1 // pred_check_branch
      %23 = sbr.rel (0) target = $region5
    $region4: #{_lambda_.1} parent=1 // pred_region
      %s25 = ssub.s32 128, 128
      %26 = vsyncadd [#allocation4], %s25
      %s28 = sshll.u32 [#allocation3], 4
      %s29 = int_to_ptr.vmem [resolvable:$true] %s28
      %31 = dma.hbm_to_vmem [thread:$0]  %s0, 128, %s29, [#allocation4]
    $region5: #{_lambda_.1} parent=1 // pred_fallthru
      _
    // Predicated region
    $region6: #{_lambda_.1} parent=1 // pred_check
      _
    $region7: #{_lambda_.1} parent=1 // pred_check_branch
      %33 = sbr.rel (0) target = $region9
    $region8: #{_lambda_.1} parent=1 // pred_region
      _
    $region9: #{_lambda_.1} parent=1 // pred_fallthru
      _
    // Predicated region
    $region10: #{_lambda_.1} parent=1 // pred_check
      _
    $region11: #{_lambda_.1} parent=1 // pred_check_branch
      %35 = sbr.rel (0) target = $region13
    $region12: #{_lambda_.1} parent=1 // pred_region
      _
    $region13: #{_lambda_.1} parent=1 // pred_fallthru
      _
    // Predicated region
    $region14: #{_lambda_.1} parent=1 // pred_check
      _
    $region15: #{_lambda_.1} parent=1 // pred_check_branch
      %37 = sbr.rel (0) target = $region17
    $region16: #{_lambda_.1} parent=1 // pred_region
      %s39 = ssub.s32 256, 256
      %40 = vsyncadd [#allocation6], %s39
      %s41 = sshll.u32 [#allocation5], 4
      %s42 = int_to_ptr.vmem [resolvable:$true] %s41
      %47 = dma.hbm_to_vmem [thread:$0]  %s3, 256, %s42, [#allocation6], 64, 64, 4
    $region17: #{_lambda_.1} parent=1 // pred_fallthru
      _
    // Predicated region
    $region18: #{_lambda_.1} parent=1 // pred_check
      _
    $region19: #{_lambda_.1} parent=1 // pred_check_branch
      %49 = sbr.rel (0) target = $region21
    $region20: #{_lambda_.1} parent=1 // pred_region
      _
    $region21: #{_lambda_.1} parent=1 // pred_fallthru
      _
    // Predicated region
    $region22: #{_lambda_.1} parent=1 // pred_check
      _
    $region23: #{_lambda_.1} parent=1 // pred_check_branch
      %51 = sbr.rel (0) target = $region25
    $region24: #{_lambda_.1} parent=1 // pred_region
      _
    $region25: #{_lambda_.1} parent=1 // pred_fallthru
      _
    // Predicated region
    $region26: #{_lambda_.1} parent=1 // pred_check
      _
    $region27: #{_lambda_.1} parent=1 // pred_check_branch
      %53 = sbr.rel (0) target = $region29
    $region28: #{_lambda_.1} parent=1 // pred_region
      _
    $region29: #{_lambda_.1} parent=1 // pred_fallthru
      _
    // Predicated region
    $region30: #{_lambda_.1} parent=1 // pred_check
      _
    $region31: #{_lambda_.1} parent=1 // pred_check_branch
      %55 = sbr.rel (0) target = $region33
    $region32: #{_lambda_.1} parent=1 // pred_region
      _
    $region33: #{_lambda_.1} parent=1 // pred_fallthru
      _
    // Predicated region
    $region34: #{_lambda_.1} parent=1 // pred_check
      _
    $region35: #{_lambda_.1} parent=1 // pred_check_branch
      %57 = sbr.rel (0) target = $region37
    $region36: #{_lambda_.1} parent=1 // pred_region
      _
    $region37: #{_lambda_.1} parent=1 // pred_fallthru
      _
    // Predicated region
    $region38: #{_lambda_.1} parent=1 // pred_check
      _
    $region39: #{_lambda_.1} parent=1 // pred_check_branch
      %59 = sbr.rel (0) target = $region41
    $region40: #{_lambda_.1} parent=1 // pred_region
      _
    $region41: #{_lambda_.1} parent=1 // pred_fallthru
      _
    // Predicated region
    $region42: #{_lambda_.1} parent=1 // pred_check
      _
    $region43: #{_lambda_.1} parent=1 // pred_check_branch
      %61 = sbr.rel (0) target = $region45
    $region44: #{_lambda_.1} parent=1 // pred_region
      _
    $region45: #{_lambda_.1} parent=1 // pred_fallthru
      _
    // Predicated region
    $region46: #{_lambda_.1} parent=1 // pred_check
      _
    $region47: #{_lambda_.1} parent=1 // pred_check_branch
      %63 = sbr.rel (0) target = $region49
    $region48: #{_lambda_.1} parent=1 // pred_region
      _
    $region49: #{_lambda_.1} parent=1 // pred_fallthru
      _
    // Predicated region
    $region50: #{_lambda_.1} parent=1 // pred_check
      _
    $region51: #{_lambda_.1} parent=1 // pred_check_branch
      %65 = sbr.rel (0) target = $region53
    $region52: #{_lambda_.1} parent=1 // pred_region
      _
    $region53: #{_lambda_.1} parent=1 // pred_fallthru
      _
    // Predicated region
    $region54: #{_lambda_.1} parent=1 // pred_check
      _
    $region55: #{_lambda_.1} parent=1 // pred_check_branch
      %67 = sbr.rel (0) target = $region57
    $region56: #{_lambda_.1} parent=1 // pred_region
      %68 = dma.done [#allocation4], 128
    $region57: #{_lambda_.1} parent=1 // pred_fallthru
      _
    // Predicated region
    $region58: #{_lambda_.1} parent=1 // pred_check
      _
    $region59: #{_lambda_.1} parent=1 // pred_check_branch
      %70 = sbr.rel (0) target = $region61
    $region60: #{_lambda_.1} parent=1 // pred_region
      %71 = dma.done [#allocation6], 256
    $region61: #{_lambda_.1} parent=1 // pred_fallthru
      _
    %v73 = vld [vmem:[#allocation3] sm:$0xff]
    %v74 = vld [vmem:[%s1] sm:$0x1]
    %v75 = vld [vmem:[%s2] sm:$0x1]
    %vm76 = vcmask 261120
    %v77 = vsel %vm76, %v73, 0.0
    %78 = vadd.xlane.f32.xlu0 %v77
    %v79 = vpop.xlane.xlu0 %78
    %v80 = vrcp.pop 32.0
    %v81 = vmul.f32 %v79, %v80
    %v82 = vsub.f32 %v73, %v81
    %v83 = vmul.f32 %v82, %v82
    %v84 = vsel %vm76, %v83, 0.0
    %85 = vadd.xlane.f32.xlu0 %v84
    %v86 = vpop.xlane.xlu0 %85
    %v87 = vmul.f32 %v86, %v80
    %v88 = vadd.f32 %v87, 1e-05
    %v89 = vrsqrt.pop %v88
    %v90 = vmul.f32 %v82, %v89
    %v92 = vlaneseq
    %v93 = vshrl.u32 %v92, 7
    %v94 = vsub.s32 0, %v93
    %v95 = vrot.slane %v74, %v94
    %v97 = vmul.f32 %v90, %v95
    %v99 = vlaneseq
    %v100 = vshrl.u32 %v99, 7
    %v101 = vsub.s32 0, %v100
    %v102 = vrot.slane %v75, %v101
    %v104 = vadd.f32 %v97, %v102
    %v105 = vpack.c.bf16 %v104, %v104
    %v106 = vld [vmem:[#allocation5] sm:$0xf]
    %v107 = vld [vmem:[#allocation5 + $0x4] sm:$0xf]
    %v108 = vld [vmem:[#allocation5 + $0x8] sm:$0xf]
    %v109 = vld [vmem:[#allocation5 + $0xc] sm:$0xf]
    %v110 = vld [vmem:[%s4] sm:$0x1]
    %v112 = vlaneseq
    %v113 = vshrl.u32 %v112, 7
    %v114 = vsub.s32 0, %v113
    %v115 = vrot.slane %v110, %v114
    %v121 = vunpack.c.l.b16 %v106
    %v122 = vunpack.c.l.b16 %v107
    %v123 = vunpack.c.l.b16 %v108
    %v124 = vunpack.c.l.b16 %v109
    %v125 = vpack.c.b16 %v122, %v121
    %v126 = vpack.c.b16 %v124, %v123
    %v130 = vsel %vm76, %v105, 0
    %132 = vmatprep.subr.bf16.mxu0 0
    %133 = vmatpush1.bf16.msra.mxu0 %v125
    %134 = vmatprep.subr.bf16.mxu0 0
    %135 = vmatpush1.bf16.msra.mxu0 %v126
    %136 = vmatprep.subr.bf16.mxu0 0
    %137 = vmatpush1.bf16.msra.mxu0 0
    %138 = vmatprep.subr.bf16.mxu0 0
    %139 = vmatpush1.bf16.msra.mxu0 0
    %140 = vmatprep.subr.bf16.mxu0 0
    %141 = vmatpush1.bf16.msra.mxu0 0
    %142 = vmatprep.subr.bf16.mxu0 0
    %143 = vmatpush1.bf16.msra.mxu0 0
    %144 = vmatprep.subr.bf16.mxu0 0
    %145 = vmatpush1.bf16.msra.mxu0 0
    %146 = vmatprep.subr.bf16.mxu0 0
    %147 = vmatpush1.bf16.msra.mxu0 0
    %148 = vmatprep.subr.bf16.mxu0 0
    %149 = vmatpush1.bf16.msra.mxu0 0
    %150 = vmatprep.subr.bf16.mxu0 0
    %151 = vmatpush1.bf16.msra.mxu0 0
    %152 = vmatprep.subr.bf16.mxu0 0
    %153 = vmatpush1.bf16.msra.mxu0 0
    %154 = vmatprep.subr.bf16.mxu0 0
    %155 = vmatpush1.bf16.msra.mxu0 0
    %156 = vmatprep.subr.bf16.mxu0 0
    %157 = vmatpush1.bf16.msra.mxu0 0
    %158 = vmatprep.subr.bf16.mxu0 0
    %159 = vmatpush1.bf16.msra.mxu0 0
    %160 = vmatprep.subr.bf16.mxu0 0
    %161 = vmatpush1.bf16.msra.mxu0 0
    %162 = vmatprep.subr.bf16.mxu0 0
    %163 = vmatpush1.bf16.msra.mxu0 0
    %164 = vmatprep.mubr.bf16.mxu0 0
    %165 = vmatmul.mubr.bf16.gmra.mrb[0].mxu0 %v130
    %v166 = vpop.f32.mrb[0].mxu0
    %v167 = vadd.f32 %v115, %v166
    %v168 = vpop.f32.mrb[0].mxu0
    %v169 = vpop.f32.mrb[0].mxu0
    %v170 = vpop.f32.mrb[0].mxu0
    %171 = vdwg.mxu0
    %v172 = vmax.f32 %v167, 0.0
    %v173 = vld [vmem:[%s5] sm:$0x1]
    %v174 = vld [vmem:[%s6] sm:$0x1]
    %v175 = vsel %vm76, %v172, 0.0
    %176 = vadd.xlane.f32.xlu0 %v175
    %v177 = vpop.xlane.xlu0 %176
    %v178 = vmul.f32 %v177, %v80
    %v179 = vsub.f32 %v172, %v178
    %v180 = vmul.f32 %v179, %v179
    %v181 = vsel %vm76, %v180, 0.0
    %182 = vadd.xlane.f32.xlu0 %v181
    %v183 = vpop.xlane.xlu0 %182
    %v184 = vmul.f32 %v183, %v80
    %v185 = vadd.f32 %v184, 1e-05
    %v186 = vrsqrt.pop %v185
    %v187 = vmul.f32 %v179, %v186
    %v189 = vlaneseq
    %v190 = vshrl.u32 %v189, 7
    %v191 = vsub.s32 0, %v190
    %v192 = vrot.slane %v173, %v191
    %v194 = vmul.f32 %v187, %v192
    %v196 = vlaneseq
    %v197 = vshrl.u32 %v196, 7
    %v198 = vsub.s32 0, %v197
    %v199 = vrot.slane %v174, %v198
    %v201 = vadd.f32 %v194, %v199
    %v202 = vpack.c.bf16 %v201, %v201
    %v203 = vld [vmem:[%s7] sm:$0xf]
    %v204 = vld [vmem:[%s7 + $0x4] sm:$0xf]
    %v205 = vld [vmem:[%s7 + $0x8] sm:$0xf]
    %v206 = vld [vmem:[%s7 + $0xc] sm:$0xf]
    %v207 = vld [vmem:[%s8] sm:$0x1]
    %v209 = vlaneseq
    %v210 = vshrl.u32 %v209, 7
    %v211 = vsub.s32 0, %v210
    %v212 = vrot.slane %v207, %v211
    %v218 = vunpack.c.l.b16 %v203
    %v219 = vunpack.c.l.b16 %v204
    %v220 = vunpack.c.l.b16 %v205
    %v221 = vunpack.c.l.b16 %v206
    %v222 = vpack.c.b16 %v219, %v218
    %v223 = vpack.c.b16 %v221, %v220
    %v227 = vsel %vm76, %v202, 0
    %229 = vmatprep.subr.bf16.mxu0 0
    %230 = vmatpush1.bf16.msra.mxu0 %v222
    %231 = vmatprep.subr.bf16.mxu0 0
    %232 = vmatpush1.bf16.msra.mxu0 %v223
    %233 = vmatprep.subr.bf16.mxu0 0
    %234 = vmatpush1.bf16.msra.mxu0 0
    %235 = vmatprep.subr.bf16.mxu0 0
    %236 = vmatpush1.bf16.msra.mxu0 0
    %237 = vmatprep.subr.bf16.mxu0 0
    %238 = vmatpush1.bf16.msra.mxu0 0
    %239 = vmatprep.subr.bf16.mxu0 0
    %240 = vmatpush1.bf16.msra.mxu0 0
    %241 = vmatprep.subr.bf16.mxu0 0
    %242 = vmatpush1.bf16.msra.mxu0 0
    %243 = vmatprep.subr.bf16.mxu0 0
    %244 = vmatpush1.bf16.msra.mxu0 0
    %245 = vmatprep.subr.bf16.mxu0 0
    %246 = vmatpush1.bf16.msra.mxu0 0
    %247 = vmatprep.subr.bf16.mxu0 0
    %248 = vmatpush1.bf16.msra.mxu0 0
    %249 = vmatprep.subr.bf16.mxu0 0
    %250 = vmatpush1.bf16.msra.mxu0 0
    %251 = vmatprep.subr.bf16.mxu0 0
    %252 = vmatpush1.bf16.msra.mxu0 0
    %253 = vmatprep.subr.bf16.mxu0 0
    %254 = vmatpush1.bf16.msra.mxu0 0
    %255 = vmatprep.subr.bf16.mxu0 0
    %256 = vmatpush1.bf16.msra.mxu0 0
    %257 = vmatprep.subr.bf16.mxu0 0
    %258 = vmatpush1.bf16.msra.mxu0 0
    %259 = vmatprep.subr.bf16.mxu0 0
    %260 = vmatpush1.bf16.msra.mxu0 0
    %261 = vmatprep.mubr.bf16.mxu0 0
    %262 = vmatmul.mubr.bf16.gmra.mrb[0].mxu0 %v227
    %v263 = vpop.f32.mrb[0].mxu0
    %v264 = vadd.f32 %v212, %v263
    %v265 = vpop.f32.mrb[0].mxu0
    %v266 = vpop.f32.mrb[0].mxu0
    %v267 = vpop.f32.mrb[0].mxu0
    %268 = vdwg.mxu0
    %v269 = vmax.f32 %v264, 0.0
    %v270 = vld [vmem:[%s9] sm:$0x1]
    %v271 = vld [vmem:[%s10] sm:$0x1]
    %v272 = vsel %vm76, %v269, 0.0
    %273 = vadd.xlane.f32.xlu0 %v272
    %v274 = vpop.xlane.xlu0 %273
    %v275 = vmul.f32 %v274, %v80
    %v276 = vsub.f32 %v269, %v275
    %v277 = vmul.f32 %v276, %v276
    %v278 = vsel %vm76, %v277, 0.0
    %279 = vadd.xlane.f32.xlu0 %v278
    %v280 = vpop.xlane.xlu0 %279
    %v281 = vmul.f32 %v280, %v80
    %v282 = vadd.f32 %v281, 1e-05
    %v283 = vrsqrt.pop %v282
    %v284 = vmul.f32 %v276, %v283
    %v286 = vlaneseq
    %v287 = vshrl.u32 %v286, 7
    %v288 = vsub.s32 0, %v287
    %v289 = vrot.slane %v270, %v288
    %v291 = vmul.f32 %v284, %v289
    %v293 = vlaneseq
    %v294 = vshrl.u32 %v293, 7
    %v295 = vsub.s32 0, %v294
    %v296 = vrot.slane %v271, %v295
    %v298 = vadd.f32 %v291, %v296
    %v299 = vpack.c.bf16 %v298, %v298
    %v300 = vld [vmem:[%s11] sm:$0xf]
    %v301 = vld [vmem:[%s11 + $0x4] sm:$0xf]
    %v302 = vld [vmem:[%s11 + $0x8] sm:$0xf]
    %v303 = vld [vmem:[%s11 + $0xc] sm:$0xf]
    %v308 = vunpack.c.l.b16 %v300
    %v309 = vunpack.c.l.b16 %v301
    %v310 = vunpack.c.l.b16 %v302
    %v311 = vunpack.c.l.b16 %v303
    %v312 = vpack.c.b16 %v309, %v308
    %v313 = vpack.c.b16 %v311, %v310
    %v317 = vsel %vm76, %v299, 0
    %319 = vmatprep.subr.bf16.mxu0 0
    %320 = vmatpush1.bf16.msra.mxu0 %v312
    %321 = vmatprep.subr.bf16.mxu0 0
    %322 = vmatpush1.bf16.msra.mxu0 %v313
    %323 = vmatprep.subr.bf16.mxu0 0
    %324 = vmatpush1.bf16.msra.mxu0 0
    %325 = vmatprep.subr.bf16.mxu0 0
    %326 = vmatpush1.bf16.msra.mxu0 0
    %327 = vmatprep.subr.bf16.mxu0 0
    %328 = vmatpush1.bf16.msra.mxu0 0
    %329 = vmatprep.subr.bf16.mxu0 0
    %330 = vmatpush1.bf16.msra.mxu0 0
    %331 = vmatprep.subr.bf16.mxu0 0
    %332 = vmatpush1.bf16.msra.mxu0 0
    %333 = vmatprep.subr.bf16.mxu0 0
    %334 = vmatpush1.bf16.msra.mxu0 0
    %335 = vmatprep.subr.bf16.mxu0 0
    %336 = vmatpush1.bf16.msra.mxu0 0
    %337 = vmatprep.subr.bf16.mxu0 0
    %338 = vmatpush1.bf16.msra.mxu0 0
    %339 = vmatprep.subr.bf16.mxu0 0
    %340 = vmatpush1.bf16.msra.mxu0 0
    %341 = vmatprep.subr.bf16.mxu0 0
    %342 = vmatpush1.bf16.msra.mxu0 0
    %343 = vmatprep.subr.bf16.mxu0 0
    %344 = vmatpush1.bf16.msra.mxu0 0
    %345 = vmatprep.subr.bf16.mxu0 0
    %346 = vmatpush1.bf16.msra.mxu0 0
    %347 = vmatprep.subr.bf16.mxu0 0
    %348 = vmatpush1.bf16.msra.mxu0 0
    %349 = vmatprep.subr.bf16.mxu0 0
    %350 = vmatpush1.bf16.msra.mxu0 0
    %351 = vmatprep.mubr.bf16.mxu0 0
    %352 = vmatmul.mubr.bf16.gmra.mrb[0].mxu0 %v317
    %v353 = vpop.f32.mrb[0].mxu0
    %v354 = vadd.f32 0.0, %v353
    %v355 = vpop.f32.mrb[0].mxu0
    %v356 = vpop.f32.mrb[0].mxu0
    %v357 = vpop.f32.mrb[0].mxu0
    %358 = vdwg.mxu0
    %v359 = vld [vmem:[#allocation2] sm:$0x1]
    %v361 = vlaneseq
    %v362 = vshrl.u32 %v361, 7
    %v363 = vsub.s32 0, %v362
    %v364 = vrot.slane %v359, %v363
    %v366 = vadd.f32 %v354, %v364
    %vm367 = vcmask 7168
    %368 = vst.msk [vmem:[%s13] sm:$0xff] %vm367, %v366
    // Predicated region
    $region62: #{_lambda_.1} parent=1 // pred_check
      _
    $region63: #{_lambda_.1} parent=1 // pred_check_branch
      %370 = sbr.rel (0) target = $region65
    $region64: #{_lambda_.1} parent=1 // pred_region
      _
    $region65: #{_lambda_.1} parent=1 // pred_fallthru
      _
    // Predicated region
    $region66: #{_lambda_.1} parent=1 // pred_check
      _
    $region67: #{_lambda_.1} parent=1 // pred_check_branch
      %372 = sbr.rel (0) target = $region69
    $region68: #{_lambda_.1} parent=1 // pred_region
      _
    $region69: #{_lambda_.1} parent=1 // pred_fallthru
      _
    %373 = vsyncpa [#allocation4], 1
    %374 = vsyncpa [#allocation6], 1

</llo_original>
